<compile_context>
chip_gen: v5e
topology: v5e:2x2
jax: 0.10.0
libtpu: 0.0.40
codegen_flags: <defaults>
</compile_context>

<pallas_src>
import functools

import jax
import jax.numpy as jnp
from jax.experimental import pallas as pl
from jax.experimental.pallas import tpu as pltpu


def _round_up(x: int, m: int) -> int:
    return ((x + m - 1) // m) * m


# --------------------------------------------------------------------------
# Hot loop: stream bf16 A_mean tiles, accumulate x_g in f32,
# fused 0.1/0.9 combine + ReLU epilogue at the last k step.
# --------------------------------------------------------------------------
def hsm_combine_kernel(a_ref, xw_ref, xhg_ref, o_ref, acc_ref, *, tk, xw_resident):
    k = pl.program_id(1)

    @pl.when(k == 0)
    def _():
        acc_ref[...] = jnp.zeros_like(acc_ref)

    if xw_resident:
        # XW lives fully in VMEM (block index is constant) -> slice the k slab.
        start = pl.multiple_of(k * tk, tk)
        xw = xw_ref[pl.ds(start, tk), :]
    else:
        xw = xw_ref[...]

    # x_g partial:  A_mean[i-tile, k-tile] @ XW[k-tile]   (bf16 in, f32 acc)
    acc_ref[...] += jnp.dot(a_ref[...], xw, preferred_element_type=jnp.float32)

    @pl.when(k == pl.num_programs(1) - 1)
    def _():
        out = 0.1 * acc_ref[...] + 0.9 * xhg_ref[...].astype(jnp.float32)
        o_ref[...] = jnp.maximum(out, 0.0).astype(o_ref.dtype)


def hsmconv_forward(X, W_t, b, A_mean, Hv2e, He2v, *, tm_req=512, tk_req=1024):
    """X: [N, C_in], W_t: [C_in, C_out], b: [C_out],
    A_mean: [N, N], Hv2e: [E, N], He2v: [N, E]  ->  [N, C_out] f32."""
    N, _ = X.shape
    C_out = W_t.shape[1]
    bf16 = jnp.bfloat16
    f32 = jnp.float32

    # ---- prologue (plain XLA): theta + hypergraph path, bf16 in / f32 acc ---
    XW = jnp.dot(X.astype(bf16), W_t.astype(bf16),
                 preferred_element_type=f32) + b.astype(f32)[None, :]
    XW_b = XW.astype(bf16)
    Y = jnp.dot(Hv2e.astype(bf16), XW_b, preferred_element_type=f32)
    X_hg = jnp.dot(He2v.astype(bf16), Y.astype(bf16), preferred_element_type=f32)
    X_hg_b = X_hg.astype(bf16)

    # ---- channel padding (lane-dense output, full MXU width) ----------------
    Cp = 128 if C_out <= 128 else _round_up(C_out, 256)

    # ---- tile sizes & per-axis node padding ---------------------------------
    cap = pl.next_power_of_2(_round_up(N, 8))  # tiny problems -> single block
    tm = min(tm_req, cap)                      # output-row tile
    tk = min(tk_req, cap)                      # contraction tile over nodes
    Np_r = _round_up(N, tm)                    # row axis padding
    Np_k = _round_up(N, tk)                    # contraction axis padding

    # ---- zero padding directly in bf16 (no f32 Np^2 round-trip) -------------
    Ap = jnp.pad(A_mean.astype(bf16), ((0, Np_r - N), (0, Np_k - N)))
    XWp = jnp.pad(XW_b, ((0, Np_k - N), (0, Cp - C_out)))
    Xhgp = jnp.pad(X_hg_b, ((0, Np_r - N), (0, Cp - C_out)))

    # ---- XW residency decision ----------------------------------------------
    xw_bytes = Np_k * Cp * 2
    xw_resident = xw_bytes <= (8 << 20)
    if xw_resident:
        xw_spec = pl.BlockSpec((Np_k, Cp), lambda i, k: (0, 0))   # VMEM-resident
    else:
        xw_spec = pl.BlockSpec((tk, Cp), lambda i, k: (k, 0))     # streamed slab

    # ---- right-sized VMEM budget (double-buffered tiles + acc + margin) -----
    est = (2 * tm * tk * 2                                   # A tiles (bf16)
           + (2 * xw_bytes if xw_resident else 2 * tk * Cp * 2)
           + 2 * tm * Cp * 2                                 # X_hg tiles (bf16)
           + 2 * tm * Cp * 4                                 # output tiles (f32)
           + tm * Cp * 4)                                    # accumulator
    vmem_limit = int(min(max(int(est * 1.5) + (2 << 20), 8 << 20), 48 << 20))

    grid = (Np_r // tm, Np_k // tk)
    kernel = functools.partial(hsm_combine_kernel, tk=tk, xw_resident=xw_resident)

    out_padded = pl.pallas_call(
        kernel,
        out_shape=jax.ShapeDtypeStruct((Np_r, Cp), f32),
        grid_spec=pltpu.PrefetchScalarGridSpec(
            num_scalar_prefetch=0,
            grid=grid,
            in_specs=[
                pl.BlockSpec((tm, tk), lambda i, k: (i, k)),   # A_mean tile (bf16)
                xw_spec,                                       # XW (bf16)
                pl.BlockSpec((tm, Cp), lambda i, k: (i, 0)),   # X_hg row tile (bf16)
            ],
            out_specs=pl.BlockSpec((tm, Cp), lambda i, k: (i, 0)),
            scratch_shapes=[pltpu.VMEM((tm, Cp), jnp.float32)],  # f32 accumulator
        ),
        compiler_params=pltpu.CompilerParams(
            dimension_semantics=("parallel", "arbitrary"),
            vmem_limit_bytes=vmem_limit,
        ),
    )(Ap, XWp, Xhgp)

    return out_padded[:N, :C_out]


# --------------------------------------------------------------------------
# Synthetic graph / hypergraph operators and pure-JAX reference
# --------------------------------------------------------------------------
def build_operators(key, N, E):
    """Deterministic synthetic graph / hypergraph, mean-normalized operators."""
    k1, k2 = jax.random.split(key)
    A = (jax.random.uniform(k1, (N, N)) < 0.3).astype(jnp.float32)
    A = jnp.maximum(A, A.T)
    A = A * (1.0 - jnp.eye(N, dtype=jnp.float32))
    deg_g = jnp.clip(A.sum(axis=1, keepdims=True), 1.0, None)
    A_mean = A / deg_g                                          # [N, N]

    H = (jax.random.uniform(k2, (N, E)) < 0.4).astype(jnp.float32)
    H = H.at[0, :].set(1.0)
    H = H.at[:, 0].set(1.0)
    deg_e = jnp.clip(H.sum(axis=0, keepdims=True), 1.0, None)   # [1, E]
    deg_v = jnp.clip(H.sum(axis=1, keepdims=True), 1.0, None)   # [N, 1]
    Hv2e = (H / deg_e).T                                        # [E, N]
    He2v = H / deg_v                                            # [N, E]
    return A_mean, Hv2e, He2v


def reference(X, W_t, b, A_mean, Hv2e, He2v):
    xw = X @ W_t + b[None, :]
    x_g = A_mean @ xw
    x_hg = He2v @ (Hv2e @ xw)
    return jnp.maximum(0.1 * x_g + 0.9 * x_hg, 0.0)


if __name__ == "__main__":
    N, E = 16, 8          # nodes, hyperedges
    C_in, C_out = 8, 32   # in_channels, out_channels

    key = jax.random.PRNGKey(0)
    kx, kw, kb, kg = jax.random.split(key, 4)

    X = jax.random.normal(kx, (N, C_in), dtype=jnp.float32)
    # nn.Linear(in, out): weight [out, in], bias [out]; pass W^T
    W = jax.random.normal(kw, (C_out, C_in), dtype=jnp.float32) * 0.1
    b = jax.random.normal(kb, (C_out,), dtype=jnp.float32) * 0.1
    W_t = W.T

    A_mean, Hv2e, He2v = build_operators(kg, N, E)

    out = hsmconv_forward(X, W_t, b, A_mean, Hv2e, He2v)
    out = jax.block_until_ready(out)

    ref = reference(X, W_t, b, A_mean, Hv2e, He2v)
    # A_mean / XW / hypergraph operators travel in bf16 -> loosened tolerance.
    assert out.shape == (N, C_out)
    assert jnp.allclose(out, ref, atol=2e-2, rtol=2e-2), "mismatch vs JAX reference"

    print("KERNEL_OK")
</pallas_src>

<mosaic_0001>
module attributes {stable_mosaic.version = 11 : i64} {
  func.func @hsm_combine_kernel(%arg0: i32, %arg1: i32, %arg2: memref<16x16xbf16, #tpu.memory_space<vmem>>, %arg3: memref<16x128xbf16, #tpu.memory_space<vmem>>, %arg4: memref<16x128xbf16, #tpu.memory_space<vmem>>, %arg5: memref<16x128xf32, #tpu.memory_space<vmem>>, %arg6: memref<16x128xf32, #tpu.memory_space<vmem>>) attributes {dimension_semantics = [#tpu.dimension_semantics<parallel>, #tpu.dimension_semantics<arbitrary>], iteration_bounds = array<i64: 1, 1>, scalar_prefetch = 0 : i64, scratch_operands = 1 : i64, tpu.core_type = #tpu.core_type<tc>, window_params = [{transform_indices = @transform_0, window_bounds = array<i64: 16, 16>}, {pipeline_mode = #tpu.pipeline_mode<synchronous>, transform_indices = @transform_1, window_bounds = array<i64: 16, 128>}, {transform_indices = @transform_2, window_bounds = array<i64: 16, 128>}, {transform_indices = @transform_3, window_bounds = array<i64: 16, 128>}]} {
    %c0_i32 = arith.constant 0 : i32
    %0 = arith.cmpi eq, %arg1, %c0_i32 : i32
    %1 = arith.extui %0 : i1 to i32
    %c0_i32_0 = arith.constant 0 : i32
    %2 = arith.cmpi ne, %1, %c0_i32_0 : i32
    scf.if %2 {
      %cst_9 = arith.constant 0.000000e+00 : f32
      %15 = vector.broadcast %cst_9 : f32 to vector<16x128xf32>
      %c0_10 = arith.constant 0 : index
      %c0_11 = arith.constant 0 : index
      %16 = vector.load %arg6[%c0_10, %c0_11] : memref<16x128xf32, #tpu.memory_space<vmem>>, vector<16x128xf32>
      tpu.vector_store %arg6[%c0_10, %c0_11], %15 {strides = array<i32>} : memref<16x128xf32, #tpu.memory_space<vmem>>, vector<16x128xf32>,
    } else {
    }
    %c16_i32 = arith.constant 16 : i32
    %3 = arith.muli %arg1, %c16_i32 : i32
    %4 = tpu.assume_multiple %3, 16 : i32
    %5 = arith.index_cast %4 : i32 to index
    %c0 = arith.constant 0 : index
    %6 = vector.load %arg3[%5, %c0] : memref<16x128xbf16, #tpu.memory_space<vmem>>, vector<16x128xbf16>
    %c0_1 = arith.constant 0 : index
    %c0_2 = arith.constant 0 : index
    %7 = vector.load %arg6[%c0_1, %c0_2] : memref<16x128xf32, #tpu.memory_space<vmem>>, vector<16x128xf32>
    %c0_3 = arith.constant 0 : index
    %c0_4 = arith.constant 0 : index
    %8 = vector.load %arg2[%c0_3, %c0_4] : memref<16x16xbf16, #tpu.memory_space<vmem>>, vector<16x16xbf16>
    %cst = arith.constant dense<0.000000e+00> : vector<16x128xf32>
    %9 = tpu.matmul %8, %6, %cst {dimension_numbers = #tpu.dot_dimension_numbers<[1], [0], [0], [1], [0, 0, 1, 1], [], []>} : vector<16x16xbf16>, vector<16x128xbf16>, vector<16x128xf32> -> vector<16x128xf32>
    %10 = arith.addf %7, %9 : vector<16x128xf32>
    %c0_5 = arith.constant 0 : index
    %c0_6 = arith.constant 0 : index
    %11 = vector.load %arg6[%c0_5, %c0_6] : memref<16x128xf32, #tpu.memory_space<vmem>>, vector<16x128xf32>
    tpu.vector_store %arg6[%c0_5, %c0_6], %10 {strides = array<i32>} : memref<16x128xf32, #tpu.memory_space<vmem>>, vector<16x128xf32>,
    %c0_i32_7 = arith.constant 0 : i32
    %12 = arith.cmpi eq, %arg1, %c0_i32_7 : i32
    %13 = arith.extui %12 : i1 to i32
    %c0_i32_8 = arith.constant 0 : i32
    %14 = arith.cmpi ne, %13, %c0_i32_8 : i32
    scf.if %14 {
      %c0_9 = arith.constant 0 : index
      %c0_10 = arith.constant 0 : index
      %15 = vector.load %arg6[%c0_9, %c0_10] : memref<16x128xf32, #tpu.memory_space<vmem>>, vector<16x128xf32>
      %cst_11 = arith.constant 1.000000e-01 : f32
      %16 = vector.broadcast %cst_11 : f32 to vector<16x128xf32>
      %17 = arith.mulf %16, %15 : vector<16x128xf32>
      %c0_12 = arith.constant 0 : index
      %c0_13 = arith.constant 0 : index
      %18 = vector.load %arg4[%c0_12, %c0_13] : memref<16x128xbf16, #tpu.memory_space<vmem>>, vector<16x128xbf16>
      %19 = arith.extf %18 : vector<16x128xbf16> to vector<16x128xf32>
      %cst_14 = arith.constant 0.899999976 : f32
      %20 = vector.broadcast %cst_14 : f32 to vector<16x128xf32>
      %21 = arith.mulf %20, %19 : vector<16x128xf32>
      %22 = arith.addf %17, %21 : vector<16x128xf32>
      %cst_15 = arith.constant 0.000000e+00 : f32
      %23 = vector.broadcast %cst_15 : f32 to vector<16x128xf32>
      %24 = arith.maximumf %22, %23 : vector<16x128xf32>
      %c0_16 = arith.constant 0 : index
      %c0_17 = arith.constant 0 : index
      %25 = vector.load %arg5[%c0_16, %c0_17] : memref<16x128xf32, #tpu.memory_space<vmem>>, vector<16x128xf32>
      tpu.vector_store %arg5[%c0_16, %c0_17], %24 {strides = array<i32>} : memref<16x128xf32, #tpu.memory_space<vmem>>, vector<16x128xf32>,
    } else {
    }
    return
  }
  func.func @transform_0(%arg0: i32, %arg1: i32) -> (i32, i32) {
    %c0_i32 = arith.constant 0 : i32
    return %arg0, %arg1 : i32, i32
  }
  func.func @transform_1(%arg0: i32, %arg1: i32) -> (i32, i32) {
    %c0_i32 = arith.constant 0 : i32
    %c0_i32_0 = arith.constant 0 : i32
    %c0_i32_1 = arith.constant 0 : i32
    return %c0_i32, %c0_i32_0 : i32, i32
  }
  func.func @transform_2(%arg0: i32, %arg1: i32) -> (i32, i32) {
    %c0_i32 = arith.constant 0 : i32
    %c0_i32_0 = arith.constant 0 : i32
    return %arg0, %c0_i32 : i32, i32
  }
  func.func @transform_3(%arg0: i32, %arg1: i32) -> (i32, i32) {
    %c0_i32 = arith.constant 0 : i32
    %c0_i32_0 = arith.constant 0 : i32
    return %arg0, %c0_i32 : i32, i32
  }
}

</mosaic_0001>

<llo_original>
// kernel: tpu_custom_call.1
$region0: #{tpu_custom_call.1}
  #allocation0 [shape = 'u32[]', space=smem, size = 0x4, offset = 0x4, fixed_abs, tag = 'smem constant byte address 0x4 - core index']
  #allocation1 [shape = 'u32[72,128]{1,0:T(1,128)}', space=vmem, size = 0x9000, scoped, tag = 'internal scratch']
  #allocation2 [shape = 'f32[16,128]{1,0:T(8,128)}', space=vmem, size = 0x2000, scoped, tag = 'scratch operand']
  %s0 = inlined_call_operand.hbm [shape: bf16[16,16], index: 0, kind: input, shape index: {}]
  %s1 = inlined_call_operand.hbm [shape: bf16[16,128], index: 1, kind: input, shape index: {}]
  %s2 = inlined_call_operand.hbm [shape: bf16[16,128], index: 2, kind: input, shape index: {}]
  %s3 = inlined_call_operand.hbm [shape: f32[16,128], index: 3, kind: output, shape index: {}]
  %s4 = sld [smem:[#allocation0]]
  $region42: #{tpu_custom_call.1} parent=0
    _
  %s6 = ssub.s32 1, %s4
  %s7 = scalar_select 0, %s6, %s4
  $region1: #{tpu_custom_call.1} parent=0
    #allocation3 [shape = 'u8[4096]{0}', space=vmem, size = 0x1000, scoped, tag = 'input window, operand 0, single buffered']
    #allocation4 [shape = 's32[1]{0}', space=sflag, size = 0x4, scoped, tag = 'scoped memory for tpu_custom_call.1']
    #allocation5 [shape = 's32[1]{0}', space=sflag, size = 0x4, scoped, tag = 'scoped memory for tpu_custom_call.1']
    #allocation6 [shape = 'u8[4096]{0}', space=vmem, size = 0x1000, scoped, tag = 'input window, operand 1, single buffered']
    #allocation7 [shape = 's32[1]{0}', space=sflag, size = 0x4, scoped, tag = 'scoped memory for tpu_custom_call.1']
    #allocation8 [shape = 'u8[4096]{0}', space=vmem, size = 0x1000, scoped, tag = 'input window, operand 2, single buffered']
    #allocation9 [shape = 'u8[8192]{0}', space=vmem, size = 0x2000, scoped, tag = 'output window, operand 0, single buffered']
    %8 = vsyncpa [#allocation4], 0
    %9 = vsyncpa [#allocation7], 0
    %10 = vsyncpa [#allocation5], 0
    // Predicated region
    $region2: #{tpu_custom_call.1} parent=1 // pred_check
      _
    $region3: #{tpu_custom_call.1} parent=1 // pred_check_branch
      %12 = sbr.rel (0) target = $region5
    $region4: #{tpu_custom_call.1} parent=1 // pred_region
      %14 = vsyncadd [#allocation4], 0
      %s15 = sshll.u32 %s0, 4
      %s16 = int_to_ptr.hbm [resolvable:$true] %s15
      %s17 = sshll.u32 [#allocation3], 4
      %s18 = int_to_ptr.vmem [resolvable:$true] %s17
      %23 = dma.hbm_to_vmem [thread:$0]  %s16, 128, %s18, [#allocation4], 64, 64, 4
    $region5: #{tpu_custom_call.1} parent=1 // pred_fallthru
      _
    // Predicated region
    $region6: #{tpu_custom_call.1} parent=1 // pred_check
      _
    $region7: #{tpu_custom_call.1} parent=1 // pred_check_branch
      %25 = sbr.rel (0) target = $region9
    $region8: #{tpu_custom_call.1} parent=1 // pred_region
      %27 = vsyncadd [#allocation7], 0
      %s28 = sshll.u32 %s1, 4
      %s29 = int_to_ptr.hbm [resolvable:$true] %s28
      %s30 = sshll.u32 [#allocation6], 4
      %s31 = int_to_ptr.vmem [resolvable:$true] %s30
      %36 = dma.hbm_to_vmem [thread:$0]  %s29, 128, %s31, [#allocation7], 64, 64, 4
    $region9: #{tpu_custom_call.1} parent=1 // pred_fallthru
      _
    // Predicated region
    $region10: #{tpu_custom_call.1} parent=1 // pred_check
      _
    $region11: #{tpu_custom_call.1} parent=1 // pred_check_branch
      %38 = sbr.rel (0) target = $region13
    $region12: #{tpu_custom_call.1} parent=1 // pred_region
      %40 = vsyncadd [#allocation7], 0
      %s41 = sshll.u32 %s2, 4
      %s42 = int_to_ptr.hbm [resolvable:$true] %s41
      %s43 = sshll.u32 [#allocation8], 4
      %s44 = int_to_ptr.vmem [resolvable:$true] %s43
      %49 = dma.hbm_to_vmem [thread:$0]  %s42, 128, %s44, [#allocation7], 64, 64, 4
    $region13: #{tpu_custom_call.1} parent=1 // pred_fallthru
      _
    // Predicated region
    $region14: #{tpu_custom_call.1} parent=1 // pred_check
      _
    $region15: #{tpu_custom_call.1} parent=1 // pred_check_branch
      %51 = sbr.rel (0) target = $region17
    $region16: #{tpu_custom_call.1} parent=1 // pred_region
      %53 = dma.done [#allocation4], 128
    $region17: #{tpu_custom_call.1} parent=1 // pred_fallthru
      _
    // Predicated region
    $region18: #{tpu_custom_call.1} parent=1 // pred_check
      _
    $region19: #{tpu_custom_call.1} parent=1 // pred_check_branch
      %55 = sbr.rel (0) target = $region21
    $region20: #{tpu_custom_call.1} parent=1 // pred_region
      %57 = dma.done [#allocation7], 128
    $region21: #{tpu_custom_call.1} parent=1 // pred_fallthru
      _
    // Predicated region
    $region22: #{tpu_custom_call.1} parent=1 // pred_check
      _
    $region23: #{tpu_custom_call.1} parent=1 // pred_check_branch
      %59 = sbr.rel (0) target = $region25
    $region24: #{tpu_custom_call.1} parent=1 // pred_region
      %61 = dma.done [#allocation7], 128
    $region25: #{tpu_custom_call.1} parent=1 // pred_fallthru
      _
    %p63 = scmp.eq.s32.totalorder 0, 0
    // Predicated region
    $region26: #{tpu_custom_call.1} parent=1 // pred_check
      %p64 = pneg %p63
    $region27: #{tpu_custom_call.1} parent=1 // pred_check_branch
      %66 = sbr.rel (%p64) target = $region29
    $region28: #{tpu_custom_call.1} parent=1 // pred_region
      %67 = vst [vmem:[#allocation2] sm:$0xff] 0.0
      %68 = vst [vmem:[#allocation2 + $0x8] sm:$0xff] 0.0
    $region29: #{tpu_custom_call.1} parent=1 // pred_fallthru
      _
    %s69 = smul.u32 0, 16
    %s70 = sshra.s32 %s69, 3
    %s71 = sand.u32 %s69, 7
    %s72 = smul.addr %s70, 4
    %s73 = scalar_lea.vmem [#allocation6], %s72
    %v74 = vld [vmem:[%s73] sm:$0xf]
    %v75 = vld [vmem:[%s73 + $0x4] sm:$0xf]
    %v76 = vld [vmem:[#allocation2] sm:$0xff]
    %v77 = vld [vmem:[#allocation2 + $0x8] sm:$0xff]
    %v78 = vld [vmem:[#allocation3] sm:$0xf]
    %v79 = vld [vmem:[#allocation3 + $0x4] sm:$0xf]
    %v82 = vunpack.c.l.b16 %v78
    %v83 = vunpack.c.l.b16 %v79
    %v84 = vpack.c.b16 %v83, %v82
    %v87 = vunpack.c.l.b16 %v74
    %v88 = vunpack.c.l.b16 %v75
    %v89 = vpack.c.b16 %v88, %v87
    %vm91 = vcmask 130048
    %v93 = vsel %vm91, %v84, 0
    %95 = vmatpush.bf16.msra.mxu0 0
    %96 = vmatpush.bf16.msra.mxu0 0
    %97 = vmatpush.bf16.msra.mxu0 0
    %98 = vmatpush.bf16.msra.mxu0 0
    %99 = vmatpush.bf16.msra.mxu0 0
    %100 = vmatpush.bf16.msra.mxu0 0
    %101 = vmatpush.bf16.msra.mxu0 0
    %102 = vmatpush.bf16.msra.mxu0 %v89
    %103 = vmatmul.bf16.gmra.mxu0 %v93
    %v104 = vpop.f32.mrf.mxu0
    %v105 = vadd.f32 0.0, %v104
    %v106 = vpop.f32.mrf.mxu0
    %v107 = vadd.f32 0.0, %v106
    %108 = vdwg.mxu0
    %v109 = vadd.f32 %v76, %v105
    %v110 = vadd.f32 %v77, %v107
    %111 = vst [vmem:[#allocation2] sm:$0xff] %v109
    %112 = vst [vmem:[#allocation2 + $0x8] sm:$0xff] %v110
    // Predicated region
    $region30: #{tpu_custom_call.1} parent=1 // pred_check
      %p113 = pneg %p63
    $region31: #{tpu_custom_call.1} parent=1 // pred_check_branch
      %115 = sbr.rel (%p113) target = $region33
    $region32: #{tpu_custom_call.1} parent=1 // pred_region
      %v116 = vld [vmem:[#allocation2] sm:$0xff]
      %v117 = vld [vmem:[#allocation2 + $0x8] sm:$0xff]
      %v118 = vmul.f32 %v116, 0.1
      %v119 = vmul.f32 %v117, 0.1
      %v120 = vld [vmem:[#allocation8] sm:$0xf]
      %v121 = vld [vmem:[#allocation8 + $0x4] sm:$0xf]
      %v122 = vunpack.c.l.bf16 %v120
      %v123 = vunpack.c.l.bf16 %v121
      %v124 = vmul.f32 %v122, 0.9
      %v125 = vmul.f32 %v123, 0.9
      %v126 = vadd.f32 %v118, %v124
      %v127 = vadd.f32 %v119, %v125
      %v128 = vmax.f32 %v126, 0.0
      %v129 = vmax.f32 %v127, 0.0
      %130 = vst [vmem:[#allocation9] sm:$0xff] %v128
      %131 = vst [vmem:[#allocation9 + $0x8] sm:$0xff] %v129
    $region33: #{tpu_custom_call.1} parent=1 // pred_fallthru
      _
    // Predicated region
    $region34: #{tpu_custom_call.1} parent=1 // pred_check
      _
    $region35: #{tpu_custom_call.1} parent=1 // pred_check_branch
      %133 = sbr.rel (0) target = $region37
    $region36: #{tpu_custom_call.1} parent=1 // pred_region
      %135 = vsyncadd [#allocation5], 0
      %s136 = sshll.u32 [#allocation9], 4
      %s137 = int_to_ptr.vmem [resolvable:$true] %s136
      %s138 = sshll.u32 %s3, 4
      %s139 = int_to_ptr.hbm [resolvable:$true] %s138
      %144 = dma.vmem_to_hbm [thread:$0]  %s137, 256, %s139, [#allocation5], 128, 128, 8
    $region37: #{tpu_custom_call.1} parent=1 // pred_fallthru
      _
    // Predicated region
    $region38: #{tpu_custom_call.1} parent=1 // pred_check
      _
    $region39: #{tpu_custom_call.1} parent=1 // pred_check_branch
      %146 = sbr.rel (0) target = $region41
    $region40: #{tpu_custom_call.1} parent=1 // pred_region
      %148 = dma.done [#allocation5], 256
    $region41: #{tpu_custom_call.1} parent=1 // pred_fallthru
      _
    %149 = vsyncpa [#allocation4], 1
    %150 = vsyncpa [#allocation7], 1
    %151 = vsyncpa [#allocation5], 1

</llo_original>
